<compile_context>
chip_gen: v5e
topology: v5e:2x2
jax: 0.10.0
libtpu: 0.0.40
codegen_flags: <defaults>
</compile_context>

<pallas_src>
import jax
import jax.numpy as jnp
from jax.experimental import pallas as pl
from jax.experimental.pallas import tpu as pltpu


def _round_up(n, m):
    return ((n + m - 1) // m) * m


def _head_kernel(x_ref, mask_ref,
                 wqkv_ref, bqkv_ref, wo_ref, bo_ref,
                 w1_ref, b1_ref, w2_ref, b2_ref,
                 out_ref):
    bt, S, E = x_ref.shape

    x2d = x_ref[...].reshape(bt * S, E).astype(jnp.bfloat16)       # (bt*S, E) bf16
    mask = mask_ref[...].reshape(bt, S).astype(jnp.float32)        # (bt, S), 1 = valid

    # Fused QKV projection; 1/sqrt(E) is already folded into the Q columns/bias.
    qkv = jnp.dot(x2d, wqkv_ref[...],
                  preferred_element_type=jnp.float32) + bqkv_ref[...]   # (bt*S, 3E) f32
    q = qkv[:, 0:E].reshape(bt, S, E).astype(jnp.bfloat16)
    k = qkv[:, E:2 * E].reshape(bt, S, E).astype(jnp.bfloat16)
    v = qkv[:, 2 * E:3 * E].reshape(bt, S, E).astype(jnp.bfloat16)

    # bf16 MXU scores, f32 accumulation; finite additive key mask (kept in f32).
    scores = jnp.einsum('bqe,bke->bqk', q, k,
                        preferred_element_type=jnp.float32)             # (bt, S, S) f32
    scores = scores + ((mask - 1.0) * jnp.float32(1e30))[:, None, :]

    # Softmax over keys; reciprocal goes to the EUP.
    m = jnp.max(scores, axis=-1, keepdims=True)
    p = jnp.exp(scores - m)
    denom = jnp.sum(p, axis=-1, keepdims=True)
    probs = p * pl.reciprocal(denom, approx=True)                       # (bt, S, S) f32

    # Mask-weighted mean pool folded before the V matmul and output projection:
    #   mean_q(mask * ((probs @ V) @ Wo + bo))
    #     = ((1/S * sum_q mask[q] * probs[q,:]) @ V) @ Wo + mean_q(mask) * bo
    pool_w = jnp.sum(mask[:, :, None] * probs, axis=1) * jnp.float32(1.0 / S)   # (bt, S)
    pooled_ctx = jnp.einsum('bxk,bke->bxe',
                            pool_w[:, None, :].astype(jnp.bfloat16), v,
                            preferred_element_type=jnp.float32)[:, 0, :]        # (bt, E)
    mask_frac = jnp.mean(mask, axis=1, keepdims=True)                           # (bt, 1)

    avg_pool = (jnp.dot(pooled_ctx.astype(jnp.bfloat16), wo_ref[...],
                        preferred_element_type=jnp.float32)
                + mask_frac * bo_ref[...])                                      # (bt, E)

    # MLP head: Linear -> ReLU -> Linear (lane-dense padded dims).
    h = jnp.dot(avg_pool.astype(jnp.bfloat16), w1_ref[...],
                preferred_element_type=jnp.float32) + b1_ref[...]
    h = jnp.maximum(h, 0.0)
    logits = jnp.dot(h.astype(jnp.bfloat16), w2_ref[...],
                     preferred_element_type=jnp.float32) + b2_ref[...]          # (bt, O_pad)

    out_ref[...] = logits[:, None, :].astype(out_ref.dtype)


def pack_params(params):
    """One-time weight repack (hoisted out of the per-call path):
    fold 1/sqrt(E) into Wq/bq, fuse QKV columns, pad MLP dims to 128 lanes,
    cast matmul weights to bf16 (biases stay f32)."""
    E = params['wq'].shape[0]
    n_hidden = params['w1'].shape[-1]
    n_output = params['w2'].shape[-1]
    H_pad = _round_up(n_hidden, 128)
    O_pad = _round_up(n_output, 128)
    scale = 1.0 / jnp.sqrt(jnp.float32(E))

    wqkv = jnp.concatenate([params['wq'] * scale, params['wk'], params['wv']],
                           axis=1).astype(jnp.bfloat16)                     # (E, 3E)
    bqkv = jnp.concatenate([params['bq'] * scale, params['bk'], params['bv']],
                           axis=1).astype(jnp.float32)                      # (1, 3E)
    w1 = jnp.pad(params['w1'], ((0, 0), (0, H_pad - n_hidden))).astype(jnp.bfloat16)
    b1 = jnp.pad(params['b1'], ((0, 0), (0, H_pad - n_hidden))).astype(jnp.float32)
    w2 = jnp.pad(params['w2'], ((0, H_pad - n_hidden), (0, O_pad - n_output))
                 ).astype(jnp.bfloat16)
    b2 = jnp.pad(params['b2'], ((0, 0), (0, O_pad - n_output))).astype(jnp.float32)
    # TODO(synk): on v7x optionally store wqkv/wo/w1/w2 as fp8 (e4m3 + per-tensor scale)
    #             to halve weight DMA bytes again, if the accuracy budget holds.
    return {
        'wqkv': wqkv, 'bqkv': bqkv,
        'wo': params['wo'].astype(jnp.bfloat16), 'bo': params['bo'].astype(jnp.float32),
        'w1': w1, 'b1': b1, 'w2': w2, 'b2': b2,
    }


def _vmem_estimate(bt, S, E, H_pad, O_pad):
    """Rough per-grid-step live VMEM bytes (double-buffered tiles + weights + temps)."""
    x_tile = bt * S * E * 4
    mask_tile = bt * S * 4
    out_tile = bt * O_pad * 4
    weights = ((3 * E * E + E * E + E * H_pad + H_pad * O_pad) * 2
               + (3 * E + E + H_pad + O_pad) * 4)
    temps = (bt * S * 3 * E * (4 + 2)          # qkv f32 + bf16 q/k/v copies
             + 2 * bt * S * S * 4)             # scores + probs f32
    return 2 * (x_tile + mask_tile + out_tile) + weights + temps + (1 << 20)


def classification_head_attn(x, attention_mask, packed, *, n_output, batch_tile=None):
    """x: (B, S, E) f32; attention_mask: (B, S) f32 (1=valid, 0=pad); packed: pack_params()."""
    B, S, E = x.shape
    H_pad = packed['w1'].shape[-1]
    O_pad = packed['w2'].shape[-1]

    # (B, 1, S) so the mask BlockSpec is always (8,128)-legal regardless of batch tile.
    mask3 = attention_mask.reshape(B, 1, S).astype(jnp.float32)

    # Batch tile: all-resident when it fits a conservative VMEM budget, else tile batch.
    # The batch grid axis is "parallel" so v7x's two TensorCores split it.
    if batch_tile is None:
        budget = 24 * 1024 * 1024
        bt = B
        while bt > 1 and _vmem_estimate(bt, S, E, H_pad, O_pad) > budget:
            bt //= 2
        while B % bt:
            bt -= 1
    else:
        bt = batch_tile
    grid = (B // bt,)

    weight_names = ('wqkv', 'bqkv', 'wo', 'bo', 'w1', 'b1', 'w2', 'b2')
    weight_args = tuple(packed[name] for name in weight_names)
    # Constant index_map -> weights stay VMEM-resident across grid steps (no re-DMA).
    weight_specs = [pl.BlockSpec(w.shape, lambda b: (0, 0)) for w in weight_args]

    in_specs = ([pl.BlockSpec((bt, S, E), lambda b: (b, 0, 0)),
                 pl.BlockSpec((bt, 1, S), lambda b: (b, 0, 0))]
                + weight_specs)
    out_specs = pl.BlockSpec((bt, 1, O_pad), lambda b: (b, 0, 0))

    # Advisory cost estimate for the XLA scheduler.
    flops = (2 * B * S * E * 3 * E          # fused QKV projection
             + 2 * B * S * S * E            # attention scores
             + 2 * B * S * E                # pooled probs @ v (folded pool)
             + 2 * B * E * E                # pooled output projection
             + 2 * B * E * H_pad            # l1
             + 2 * B * H_pad * O_pad)       # l_out
    bytes_accessed = (x.size * 4 + mask3.size * 4 + B * O_pad * 4
                      + sum(int(w.size) * w.dtype.itemsize for w in weight_args))
    cost = pl.CostEstimate(flops=flops, transcendentals=B * S * S,
                           bytes_accessed=bytes_accessed)

    vmem_limit = int(min(64 * 1024 * 1024,
                         max(32 * 1024 * 1024,
                             2 * _vmem_estimate(bt, S, E, H_pad, O_pad))))

    out = pl.pallas_call(
        _head_kernel,
        grid=grid,
        in_specs=in_specs,
        out_specs=out_specs,
        out_shape=jax.ShapeDtypeStruct((B, 1, O_pad), jnp.float32),
        compiler_params=pltpu.CompilerParams(
            dimension_semantics=("parallel",),
            vmem_limit_bytes=vmem_limit),
        cost_estimate=cost,
    )(x, mask3, *weight_args)
    return out[:, 0, :n_output]


def init_params(key, embed_dim, n_hidden, n_output):
    ks = jax.random.split(key, 8)
    s = 0.05
    p = {
        'wq': s * jax.random.normal(ks[0], (embed_dim, embed_dim), jnp.float32),
        'wk': s * jax.random.normal(ks[1], (embed_dim, embed_dim), jnp.float32),
        'wv': s * jax.random.normal(ks[2], (embed_dim, embed_dim), jnp.float32),
        'wo': s * jax.random.normal(ks[3], (embed_dim, embed_dim), jnp.float32),
        'w1': s * jax.random.normal(ks[4], (embed_dim, n_hidden), jnp.float32),
        'w2': s * jax.random.normal(ks[5], (n_hidden, n_output), jnp.float32),
        'bq': 0.01 * jax.random.normal(ks[6], (1, embed_dim), jnp.float32),
        'bk': jnp.zeros((1, embed_dim), jnp.float32),
        'bv': 0.01 * jax.random.normal(ks[7], (1, embed_dim), jnp.float32),
        'bo': jnp.zeros((1, embed_dim), jnp.float32),
        'b1': jnp.zeros((1, n_hidden), jnp.float32),
        'b2': jnp.zeros((1, n_output), jnp.float32),
    }
    return p


def reference_forward(x, attention_mask, p):
    """Pure-JAX f32 reference mirroring the PyTorch module (no dropout)."""
    E = x.shape[-1]
    q = jnp.einsum('bse,ef->bsf', x, p['wq']) + p['bq']
    k = jnp.einsum('bse,ef->bsf', x, p['wk']) + p['bk']
    v = jnp.einsum('bse,ef->bsf', x, p['wv']) + p['bv']
    scores = jnp.einsum('bqe,bke->bqk', q, k) / jnp.sqrt(jnp.float32(E))
    scores = jnp.where(attention_mask[:, None, :] > 0.5, scores, -jnp.inf)
    probs = jax.nn.softmax(scores, axis=-1)
    ctx = jnp.einsum('bqk,bke->bqe', probs, v)
    attn_out = jnp.einsum('bqe,ef->bqf', ctx, p['wo']) + p['bo']
    masked = attention_mask[:, :, None] * attn_out
    avg = jnp.mean(masked, axis=1)   # divides by full S, exactly like torch.mean
    h = jnp.maximum(avg @ p['w1'] + p['b1'], 0.0)
    return h @ p['w2'] + p['b2']


if __name__ == "__main__":
    # Small shapes consistent with the module's forward: (B, S, E)
    B, S = 2, 8
    embed_dim, n_hidden, n_output = 128, 64, 3

    key = jax.random.PRNGKey(0)
    kx, kp = jax.random.split(key)

    x = jax.random.normal(kx, (B, S, embed_dim), jnp.float32)
    # attention_mask: 1 = valid token, 0 = padding (per-sequence lengths 8 and 5)
    lengths = jnp.array([8, 5], dtype=jnp.int32)
    attention_mask = (jnp.arange(S)[None, :] < lengths[:, None]).astype(jnp.float32)

    params = init_params(kp, embed_dim, n_hidden, n_output)

    # One-time repack (fold scale, fuse QKV, pad to 128 lanes, bf16 cast) — per-call
    # forward only DMAs the already-packed bf16 weights.
    packed = jax.block_until_ready(pack_params(params))

    fwd = jax.jit(lambda xx, mm: classification_head_attn(
        xx, mm, packed, n_output=n_output))
    logits = jax.block_until_ready(fwd(x, attention_mask))

    ref = reference_forward(x, attention_mask, params)
    assert logits.shape == (B, n_output)
    # Tolerance accounts for bf16 MXU operands (f32 accumulation) and the EUP approx
    # reciprocal in the softmax.
    assert jnp.allclose(logits, ref, rtol=2e-2, atol=2e-2), (logits, ref)

    print("KERNEL_OK")
</pallas_src>

<mosaic_0001>
module attributes {stable_mosaic.version = 11 : i64} {
  func.func @_head_kernel(%arg0: i32, %arg1: memref<2x8x128xf32, #tpu.memory_space<vmem>>, %arg2: memref<2x1x8xf32, #tpu.memory_space<vmem>>, %arg3: memref<128x384xbf16, #tpu.memory_space<vmem>>, %arg4: memref<1x384xf32, #tpu.memory_space<vmem>>, %arg5: memref<128x128xbf16, #tpu.memory_space<vmem>>, %arg6: memref<1x128xf32, #tpu.memory_space<vmem>>, %arg7: memref<128x128xbf16, #tpu.memory_space<vmem>>, %arg8: memref<1x128xf32, #tpu.memory_space<vmem>>, %arg9: memref<128x128xbf16, #tpu.memory_space<vmem>>, %arg10: memref<1x128xf32, #tpu.memory_space<vmem>>, %arg11: memref<2x1x128xf32, #tpu.memory_space<vmem>>) attributes {dimension_semantics = [#tpu.dimension_semantics<parallel>], iteration_bounds = array<i64: 1>, scalar_prefetch = 0 : i64, scratch_operands = 0 : i64, tpu.core_type = #tpu.core_type<tc>, window_params = [{transform_indices = @transform_0, window_bounds = array<i64: 2, 8, 128>}, {transform_indices = @transform_1, window_bounds = array<i64: 2, 1, 8>}, {pipeline_mode = #tpu.pipeline_mode<synchronous>, transform_indices = @transform_2, window_bounds = array<i64: 128, 384>}, {pipeline_mode = #tpu.pipeline_mode<synchronous>, transform_indices = @transform_3, window_bounds = array<i64: 1, 384>}, {pipeline_mode = #tpu.pipeline_mode<synchronous>, transform_indices = @transform_4, window_bounds = array<i64: 128, 128>}, {pipeline_mode = #tpu.pipeline_mode<synchronous>, transform_indices = @transform_5, window_bounds = array<i64: 1, 128>}, {pipeline_mode = #tpu.pipeline_mode<synchronous>, transform_indices = @transform_6, window_bounds = array<i64: 128, 128>}, {pipeline_mode = #tpu.pipeline_mode<synchronous>, transform_indices = @transform_7, window_bounds = array<i64: 1, 128>}, {pipeline_mode = #tpu.pipeline_mode<synchronous>, transform_indices = @transform_8, window_bounds = array<i64: 128, 128>}, {pipeline_mode = #tpu.pipeline_mode<synchronous>, transform_indices = @transform_9, window_bounds = array<i64: 1, 128>}, {transform_indices = @transform_10, window_bounds = array<i64: 2, 1, 128>}]} {
    %c0 = arith.constant 0 : index
    %c0_0 = arith.constant 0 : index
    %c0_1 = arith.constant 0 : index
    %0 = vector.load %arg1[%c0, %c0_0, %c0_1] : memref<2x8x128xf32, #tpu.memory_space<vmem>>, vector<2x8x128xf32>
    %1 = vector.shape_cast %0 : vector<2x8x128xf32> to vector<16x128xf32>
    %2 = arith.truncf %1 : vector<16x128xf32> to vector<16x128xbf16>
    %c0_2 = arith.constant 0 : index
    %c0_3 = arith.constant 0 : index
    %c0_4 = arith.constant 0 : index
    %3 = vector.load %arg2[%c0_2, %c0_3, %c0_4] : memref<2x1x8xf32, #tpu.memory_space<vmem>>, vector<2x1x8xf32>
    %4 = vector.shape_cast %3 : vector<2x1x8xf32> to vector<2x8xf32>
    %c0_5 = arith.constant 0 : index
    %c0_6 = arith.constant 0 : index
    %5 = vector.load %arg3[%c0_5, %c0_6] : memref<128x384xbf16, #tpu.memory_space<vmem>>, vector<128x384xbf16>
    %cst = arith.constant dense<0.000000e+00> : vector<16x384xf32>
    %6 = tpu.matmul %2, %5, %cst {dimension_numbers = #tpu.dot_dimension_numbers<[1], [0], [0], [1], [0, 0, 1, 1], [], []>} : vector<16x128xbf16>, vector<128x384xbf16>, vector<16x384xf32> -> vector<16x384xf32>
    %c0_7 = arith.constant 0 : index
    %c0_8 = arith.constant 0 : index
    %7 = vector.load %arg4[%c0_7, %c0_8] : memref<1x384xf32, #tpu.memory_space<vmem>>, vector<1x384xf32>
    %8 = vector.broadcast %7 : vector<1x384xf32> to vector<16x384xf32>
    %9 = arith.addf %6, %8 : vector<16x384xf32>
    %10 = vector.extract_strided_slice %9 {offsets = [0, 0], sizes = [16, 128], strides = [1, 1]} : vector<16x384xf32> to vector<16x128xf32>
    %11 = vector.shape_cast %10 : vector<16x128xf32> to vector<2x8x128xf32>
    %12 = arith.truncf %11 : vector<2x8x128xf32> to vector<2x8x128xbf16>
    %13 = vector.extract_strided_slice %9 {offsets = [0, 128], sizes = [16, 128], strides = [1, 1]} : vector<16x384xf32> to vector<16x128xf32>
    %14 = vector.shape_cast %13 : vector<16x128xf32> to vector<2x8x128xf32>
    %15 = arith.truncf %14 : vector<2x8x128xf32> to vector<2x8x128xbf16>
    %16 = vector.extract_strided_slice %9 {offsets = [0, 256], sizes = [16, 128], strides = [1, 1]} : vector<16x384xf32> to vector<16x128xf32>
    %17 = vector.shape_cast %16 : vector<16x128xf32> to vector<2x8x128xf32>
    %18 = arith.truncf %17 : vector<2x8x128xf32> to vector<2x8x128xbf16>
    "tpu.trace_start"() <{level = 10 : i32, message = "bqe,bke->bqk"}> : () -> ()
    %cst_9 = arith.constant dense<0.000000e+00> : vector<2x8x8xf32>
    %19 = tpu.matmul %12, %15, %cst_9 {dimension_numbers = #tpu.dot_dimension_numbers<[2], [2], [1], [1], [0, 0, 0, 1, 1, 1], [0], [0]>} : vector<2x8x128xbf16>, vector<2x8x128xbf16>, vector<2x8x8xf32> -> vector<2x8x8xf32>
    "tpu.trace_stop"() : () -> ()
    %cst_10 = arith.constant 1.000000e+00 : f32
    %20 = vector.broadcast %cst_10 : f32 to vector<2x8xf32>
    %21 = arith.subf %4, %20 : vector<2x8xf32>
    %cst_11 = arith.constant 1.000000e+30 : f32
    %22 = vector.broadcast %cst_11 : f32 to vector<2x8xf32>
    %23 = arith.mulf %21, %22 : vector<2x8xf32>
    %24 = vector.shape_cast %23 : vector<2x8xf32> to vector<2x1x8xf32>
    %25 = vector.broadcast %24 : vector<2x1x8xf32> to vector<2x8x8xf32>
    %26 = arith.addf %19, %25 : vector<2x8x8xf32>
    %cst_12 = arith.constant dense<0xFF800000> : vector<2x8xf32>
    %27 = vector.multi_reduction <maximumf>, %26, %cst_12 [2] : vector<2x8x8xf32> to vector<2x8xf32>
    %28 = vector.shape_cast %27 : vector<2x8xf32> to vector<2x8x1xf32>
    %29 = vector.broadcast %28 : vector<2x8x1xf32> to vector<2x8x8xf32>
    %30 = arith.subf %26, %29 : vector<2x8x8xf32>
    %31 = math.exp %30 : vector<2x8x8xf32>
    %cst_13 = arith.constant dense<0.000000e+00> : vector<2x8xf32>
    %32 = vector.multi_reduction <add>, %31, %cst_13 [2] : vector<2x8x8xf32> to vector<2x8xf32>
    %33 = vector.shape_cast %32 : vector<2x8xf32> to vector<2x8x1xf32>
    %34 = tpu.reciprocal %33 {approx = true} : vector<2x8x1xf32> -> vector<2x8x1xf32>
    %35 = vector.broadcast %34 : vector<2x8x1xf32> to vector<2x8x8xf32>
    %36 = arith.mulf %31, %35 : vector<2x8x8xf32>
    %37 = vector.shape_cast %4 : vector<2x8xf32> to vector<2x8x1xf32>
    %38 = vector.broadcast %37 : vector<2x8x1xf32> to vector<2x8x8xf32>
    %39 = arith.mulf %38, %36 : vector<2x8x8xf32>
    %cst_14 = arith.constant dense<0.000000e+00> : vector<2x8xf32>
    %40 = vector.multi_reduction <add>, %39, %cst_14 [1] : vector<2x8x8xf32> to vector<2x8xf32>
    %cst_15 = arith.constant 1.250000e-01 : f32
    %41 = vector.broadcast %cst_15 : f32 to vector<2x8xf32>
    %42 = arith.mulf %40, %41 : vector<2x8xf32>
    %43 = vector.shape_cast %42 : vector<2x8xf32> to vector<2x1x8xf32>
    %44 = arith.truncf %43 : vector<2x1x8xf32> to vector<2x1x8xbf16>
    "tpu.trace_start"() <{level = 10 : i32, message = "bxk,bke->bxe"}> : () -> ()
    %cst_16 = arith.constant dense<0.000000e+00> : vector<2x1x128xf32>
    %45 = tpu.matmul %44, %18, %cst_16 {dimension_numbers = #tpu.dot_dimension_numbers<[2], [1], [1], [2], [0, 0, 0, 1, 1, 2], [0], [0]>} : vector<2x1x8xbf16>, vector<2x8x128xbf16>, vector<2x1x128xf32> -> vector<2x1x128xf32>
    "tpu.trace_stop"() : () -> ()
    %46 = vector.shape_cast %45 : vector<2x1x128xf32> to vector<2x128xf32>
    %cst_17 = arith.constant dense<0.000000e+00> : vector<2xf32>
    %47 = vector.multi_reduction <add>, %4, %cst_17 [1] : vector<2x8xf32> to vector<2xf32>
    %48 = vector.shape_cast %47 : vector<2xf32> to vector<2x1xf32>
    %cst_18 = arith.constant 8.000000e+00 : f32
    %49 = vector.broadcast %cst_18 : f32 to vector<2x1xf32>
    %50 = arith.divf %48, %49 : vector<2x1xf32>
    %51 = arith.truncf %46 : vector<2x128xf32> to vector<2x128xbf16>
    %c0_19 = arith.constant 0 : index
    %c0_20 = arith.constant 0 : index
    %52 = vector.load %arg5[%c0_19, %c0_20] : memref<128x128xbf16, #tpu.memory_space<vmem>>, vector<128x128xbf16>
    %cst_21 = arith.constant dense<0.000000e+00> : vector<2x128xf32>
    %53 = tpu.matmul %51, %52, %cst_21 {dimension_numbers = #tpu.dot_dimension_numbers<[1], [0], [0], [1], [0, 0, 1, 1], [], []>} : vector<2x128xbf16>, vector<128x128xbf16>, vector<2x128xf32> -> vector<2x128xf32>
    %c0_22 = arith.constant 0 : index
    %c0_23 = arith.constant 0 : index
    %54 = vector.load %arg6[%c0_22, %c0_23] : memref<1x128xf32, #tpu.memory_space<vmem>>, vector<1x128xf32>
    %55 = vector.broadcast %50 : vector<2x1xf32> to vector<2x128xf32>
    %56 = vector.broadcast %54 : vector<1x128xf32> to vector<2x128xf32>
    %57 = arith.mulf %55, %56 : vector<2x128xf32>
    %58 = arith.addf %53, %57 : vector<2x128xf32>
    %59 = arith.truncf %58 : vector<2x128xf32> to vector<2x128xbf16>
    %c0_24 = arith.constant 0 : index
    %c0_25 = arith.constant 0 : index
    %60 = vector.load %arg7[%c0_24, %c0_25] : memref<128x128xbf16, #tpu.memory_space<vmem>>, vector<128x128xbf16>
    %cst_26 = arith.constant dense<0.000000e+00> : vector<2x128xf32>
    %61 = tpu.matmul %59, %60, %cst_26 {dimension_numbers = #tpu.dot_dimension_numbers<[1], [0], [0], [1], [0, 0, 1, 1], [], []>} : vector<2x128xbf16>, vector<128x128xbf16>, vector<2x128xf32> -> vector<2x128xf32>
    %c0_27 = arith.constant 0 : index
    %c0_28 = arith.constant 0 : index
    %62 = vector.load %arg8[%c0_27, %c0_28] : memref<1x128xf32, #tpu.memory_space<vmem>>, vector<1x128xf32>
    %63 = vector.broadcast %62 : vector<1x128xf32> to vector<2x128xf32>
    %64 = arith.addf %61, %63 : vector<2x128xf32>
    %cst_29 = arith.constant 0.000000e+00 : f32
    %65 = vector.broadcast %cst_29 : f32 to vector<2x128xf32>
    %66 = arith.maximumf %64, %65 : vector<2x128xf32>
    %67 = arith.truncf %66 : vector<2x128xf32> to vector<2x128xbf16>
    %c0_30 = arith.constant 0 : index
    %c0_31 = arith.constant 0 : index
    %68 = vector.load %arg9[%c0_30, %c0_31] : memref<128x128xbf16, #tpu.memory_space<vmem>>, vector<128x128xbf16>
    %cst_32 = arith.constant dense<0.000000e+00> : vector<2x128xf32>
    %69 = tpu.matmul %67, %68, %cst_32 {dimension_numbers = #tpu.dot_dimension_numbers<[1], [0], [0], [1], [0, 0, 1, 1], [], []>} : vector<2x128xbf16>, vector<128x128xbf16>, vector<2x128xf32> -> vector<2x128xf32>
    %c0_33 = arith.constant 0 : index
    %c0_34 = arith.constant 0 : index
    %70 = vector.load %arg10[%c0_33, %c0_34] : memref<1x128xf32, #tpu.memory_space<vmem>>, vector<1x128xf32>
    %71 = vector.broadcast %70 : vector<1x128xf32> to vector<2x128xf32>
    %72 = arith.addf %69, %71 : vector<2x128xf32>
    %73 = vector.shape_cast %72 : vector<2x128xf32> to vector<2x1x128xf32>
    %c0_35 = arith.constant 0 : index
    %c0_36 = arith.constant 0 : index
    %c0_37 = arith.constant 0 : index
    %74 = vector.load %arg11[%c0_35, %c0_36, %c0_37] : memref<2x1x128xf32, #tpu.memory_space<vmem>>, vector<2x1x128xf32>
    tpu.vector_store %arg11[%c0_35, %c0_36, %c0_37], %73 {strides = array<i32>} : memref<2x1x128xf32, #tpu.memory_space<vmem>>, vector<2x1x128xf32>,
    return
  }
  func.func @transform_0(%arg0: i32) -> (i32, i32, i32) {
    %c0_i32 = arith.constant 0 : i32
    %c0_i32_0 = arith.constant 0 : i32
    %c0_i32_1 = arith.constant 0 : i32
    return %arg0, %c0_i32, %c0_i32_0 : i32, i32, i32
  }
  func.func @transform_1(%arg0: i32) -> (i32, i32, i32) {
    %c0_i32 = arith.constant 0 : i32
    %c0_i32_0 = arith.constant 0 : i32
    %c0_i32_1 = arith.constant 0 : i32
    return %arg0, %c0_i32, %c0_i32_0 : i32, i32, i32
  }
  func.func @transform_2(%arg0: i32) -> (i32, i32) {
    %c0_i32 = arith.constant 0 : i32
    %c0_i32_0 = arith.constant 0 : i32
    %c0_i32_1 = arith.constant 0 : i32
    return %c0_i32, %c0_i32_0 : i32, i32
  }
  func.func @transform_3(%arg0: i32) -> (i32, i32) {
    %c0_i32 = arith.constant 0 : i32
    %c0_i32_0 = arith.constant 0 : i32
    %c0_i32_1 = arith.constant 0 : i32
    return %c0_i32, %c0_i32_0 : i32, i32
  }
  func.func @transform_4(%arg0: i32) -> (i32, i32) {
    %c0_i32 = arith.constant 0 : i32
    %c0_i32_0 = arith.constant 0 : i32
    %c0_i32_1 = arith.constant 0 : i32
    return %c0_i32, %c0_i32_0 : i32, i32
  }
  func.func @transform_5(%arg0: i32) -> (i32, i32) {
    %c0_i32 = arith.constant 0 : i32
    %c0_i32_0 = arith.constant 0 : i32
    %c0_i32_1 = arith.constant 0 : i32
    return %c0_i32, %c0_i32_0 : i32, i32
  }
  func.func @transform_6(%arg0: i32) -> (i32, i32) {
    %c0_i32 = arith.constant 0 : i32
    %c0_i32_0 = arith.constant 0 : i32
    %c0_i32_1 = arith.constant 0 : i32
    return %c0_i32, %c0_i32_0 : i32, i32
  }
  func.func @transform_7(%arg0: i32) -> (i32, i32) {
    %c0_i32 = arith.constant 0 : i32
    %c0_i32_0 = arith.constant 0 : i32
    %c0_i32_1 = arith.constant 0 : i32
    return %c0_i32, %c0_i32_0 : i32, i32
  }
  func.func @transform_8(%arg0: i32) -> (i32, i32) {
    %c0_i32 = arith.constant 0 : i32
    %c0_i32_0 = arith.constant 0 : i32
    %c0_i32_1 = arith.constant 0 : i32
    return %c0_i32, %c0_i32_0 : i32, i32
  }
  func.func @transform_9(%arg0: i32) -> (i32, i32) {
    %c0_i32 = arith.constant 0 : i32
    %c0_i32_0 = arith.constant 0 : i32
    %c0_i32_1 = arith.constant 0 : i32
    return %c0_i32, %c0_i32_0 : i32, i32
  }
  func.func @transform_10(%arg0: i32) -> (i32, i32, i32) {
    %c0_i32 = arith.constant 0 : i32
    %c0_i32_0 = arith.constant 0 : i32
    %c0_i32_1 = arith.constant 0 : i32
    return %arg0, %c0_i32, %c0_i32_0 : i32, i32, i32
  }
}

</mosaic_0001>

<llo_original>
// kernel: _lambda_.1
$region0: #{_lambda_.1}
  #allocation0 [shape = 'u32[]', space=smem, size = 0x4, offset = 0x4, fixed_abs, tag = 'smem constant byte address 0x4 - core index']
  #allocation1 [shape = 'u32[72,128]{1,0:T(1,128)}', space=vmem, size = 0x9000, scoped, tag = 'internal scratch']
  %s0 = inlined_call_operand.hbm [shape: f32[2,8,128], index: 0, kind: input, shape index: {}]
  %s1 = inlined_call_operand.vmem [shape: f32[2,1,8], index: 1, kind: input, shape index: {}]
  %s2 = inlined_call_operand.hbm [shape: bf16[128,384], index: 2, kind: input, shape index: {}]
  %s3 = inlined_call_operand.vmem [shape: f32[1,384], index: 3, kind: input, shape index: {}]
  %s4 = inlined_call_operand.hbm [shape: bf16[128,128], index: 4, kind: input, shape index: {}]
  %s5 = inlined_call_operand.vmem [shape: f32[1,128], index: 5, kind: input, shape index: {}, may-alias: {5,7,9}]
  %s6 = inlined_call_operand.hbm [shape: bf16[128,128], index: 6, kind: input, shape index: {}]
  %s7 = inlined_call_operand.vmem [shape: f32[1,128], index: 7, kind: input, shape index: {}, may-alias: {5,7,9}]
  %s8 = inlined_call_operand.hbm [shape: bf16[128,128], index: 8, kind: input, shape index: {}]
  %s9 = inlined_call_operand.vmem [shape: f32[1,128], index: 9, kind: input, shape index: {}, may-alias: {5,7,9}]
  %s10 = inlined_call_operand.hbm [shape: f32[2,1,128], index: 10, kind: output, shape index: {}]
  %s11 = sld [smem:[#allocation0]]
  $region70: #{_lambda_.1} parent=0
    _
  %s13 = ssub.s32 1, %s11
  %s14 = scalar_select 0, %s13, %s11
  $region1: #{_lambda_.1} parent=0
    #allocation2 [shape = 'u8[8192]{0}', space=vmem, size = 0x2000, scoped, tag = 'input window, operand 0, single buffered']
    #allocation3 [shape = 's32[1]{0}', space=sflag, size = 0x4, scoped, tag = 'scoped memory for _lambda_.1']
    #allocation4 [shape = 's32[1]{0}', space=sflag, size = 0x4, scoped, tag = 'scoped memory for _lambda_.1']
    #allocation5 [shape = 'u8[98304]{0}', space=vmem, size = 0x18000, scoped, tag = 'input window, operand 2, single buffered']
    #allocation6 [shape = 's32[1]{0}', space=sflag, size = 0x4, scoped, tag = 'scoped memory for _lambda_.1']
    #allocation7 [shape = 'u8[32768]{0}', space=vmem, size = 0x8000, scoped, tag = 'input window, operand 4, single buffered']
    #allocation8 [shape = 'u8[32768]{0}', space=vmem, size = 0x8000, scoped, tag = 'input window, operand 6, single buffered']
    #allocation9 [shape = 's32[1]{0}', space=sflag, size = 0x4, scoped, tag = 'scoped memory for _lambda_.1']
    #allocation10 [shape = 'u8[32768]{0}', space=vmem, size = 0x8000, scoped, tag = 'input window, operand 8, single buffered']
    #allocation11 [shape = 'u8[1024]{0}', space=vmem, size = 0x400, scoped, tag = 'output window, operand 0, single buffered']
    %15 = vsyncpa [#allocation3], 0
    %16 = vsyncpa [#allocation6], 0
    %17 = vsyncpa [#allocation9], 0
    %18 = vsyncpa [#allocation4], 0
    // Predicated region
    $region2: #{_lambda_.1} parent=1 // pred_check
      _
    $region3: #{_lambda_.1} parent=1 // pred_check_branch
      %20 = sbr.rel (0) target = $region5
    $region4: #{_lambda_.1} parent=1 // pred_region
      %22 = vsyncadd [#allocation3], 0
      %s23 = sshll.u32 %s0, 4
      %s24 = int_to_ptr.hbm [resolvable:$true] %s23
      %s25 = sshll.u32 [#allocation2], 4
      %s26 = int_to_ptr.vmem [resolvable:$true] %s25
      %31 = dma.hbm_to_vmem [thread:$0]  %s24, 256, %s26, [#allocation3], 128, 128, 8
    $region5: #{_lambda_.1} parent=1 // pred_fallthru
      _
    // Predicated region
    $region6: #{_lambda_.1} parent=1 // pred_check
      _
    $region7: #{_lambda_.1} parent=1 // pred_check_branch
      %33 = sbr.rel (0) target = $region9
    $region8: #{_lambda_.1} parent=1 // pred_region
      _
    $region9: #{_lambda_.1} parent=1 // pred_fallthru
      _
    // Predicated region
    $region10: #{_lambda_.1} parent=1 // pred_check
      _
    $region11: #{_lambda_.1} parent=1 // pred_check_branch
      %35 = sbr.rel (0) target = $region13
    $region12: #{_lambda_.1} parent=1 // pred_region
      %37 = vsyncadd [#allocation6], 0
      %s38 = sshll.u32 %s2, 4
      %s39 = int_to_ptr.hbm [resolvable:$true] %s38
      %s40 = sshll.u32 [#allocation5], 4
      %s41 = int_to_ptr.vmem [resolvable:$true] %s40
      %46 = dma.hbm_to_vmem [thread:$0]  %s39, 3072, %s41, [#allocation6], 192, 192, 12
    $region13: #{_lambda_.1} parent=1 // pred_fallthru
      _
    // Predicated region
    $region14: #{_lambda_.1} parent=1 // pred_check
      _
    $region15: #{_lambda_.1} parent=1 // pred_check_branch
      %48 = sbr.rel (0) target = $region17
    $region16: #{_lambda_.1} parent=1 // pred_region
      _
    $region17: #{_lambda_.1} parent=1 // pred_fallthru
      _
    // Predicated region
    $region18: #{_lambda_.1} parent=1 // pred_check
      _
    $region19: #{_lambda_.1} parent=1 // pred_check_branch
      %50 = sbr.rel (0) target = $region21
    $region20: #{_lambda_.1} parent=1 // pred_region
      %52 = vsyncadd [#allocation6], 0
      %s53 = sshll.u32 %s4, 4
      %s54 = int_to_ptr.hbm [resolvable:$true] %s53
      %s55 = sshll.u32 [#allocation7], 4
      %s56 = int_to_ptr.vmem [resolvable:$true] %s55
      %61 = dma.hbm_to_vmem [thread:$0]  %s54, 1024, %s56, [#allocation6], 64, 64, 4
    $region21: #{_lambda_.1} parent=1 // pred_fallthru
      _
    // Predicated region
    $region22: #{_lambda_.1} parent=1 // pred_check
      _
    $region23: #{_lambda_.1} parent=1 // pred_check_branch
      %63 = sbr.rel (0) target = $region25
    $region24: #{_lambda_.1} parent=1 // pred_region
      _
    $region25: #{_lambda_.1} parent=1 // pred_fallthru
      _
    // Predicated region
    $region26: #{_lambda_.1} parent=1 // pred_check
      _
    $region27: #{_lambda_.1} parent=1 // pred_check_branch
      %65 = sbr.rel (0) target = $region29
    $region28: #{_lambda_.1} parent=1 // pred_region
      %67 = vsyncadd [#allocation9], 0
      %s68 = sshll.u32 %s6, 4
      %s69 = int_to_ptr.hbm [resolvable:$true] %s68
      %s70 = sshll.u32 [#allocation8], 4
      %s71 = int_to_ptr.vmem [resolvable:$true] %s70
      %76 = dma.hbm_to_vmem [thread:$0]  %s69, 1024, %s71, [#allocation9], 64, 64, 4
    $region29: #{_lambda_.1} parent=1 // pred_fallthru
      _
    // Predicated region
    $region30: #{_lambda_.1} parent=1 // pred_check
      _
    $region31: #{_lambda_.1} parent=1 // pred_check_branch
      %78 = sbr.rel (0) target = $region33
    $region32: #{_lambda_.1} parent=1 // pred_region
      _
    $region33: #{_lambda_.1} parent=1 // pred_fallthru
      _
    // Predicated region
    $region34: #{_lambda_.1} parent=1 // pred_check
      _
    $region35: #{_lambda_.1} parent=1 // pred_check_branch
      %80 = sbr.rel (0) target = $region37
    $region36: #{_lambda_.1} parent=1 // pred_region
      %82 = vsyncadd [#allocation9], 0
      %s83 = sshll.u32 %s8, 4
      %s84 = int_to_ptr.hbm [resolvable:$true] %s83
      %s85 = sshll.u32 [#allocation10], 4
      %s86 = int_to_ptr.vmem [resolvable:$true] %s85
      %91 = dma.hbm_to_vmem [thread:$0]  %s84, 1024, %s86, [#allocation9], 64, 64, 4
    $region37: #{_lambda_.1} parent=1 // pred_fallthru
      _
    // Predicated region
    $region38: #{_lambda_.1} parent=1 // pred_check
      _
    $region39: #{_lambda_.1} parent=1 // pred_check_branch
      %93 = sbr.rel (0) target = $region41
    $region40: #{_lambda_.1} parent=1 // pred_region
      _
    $region41: #{_lambda_.1} parent=1 // pred_fallthru
      _
    // Predicated region
    $region42: #{_lambda_.1} parent=1 // pred_check
      _
    $region43: #{_lambda_.1} parent=1 // pred_check_branch
      %95 = sbr.rel (0) target = $region45
    $region44: #{_lambda_.1} parent=1 // pred_region
      %97 = dma.done [#allocation3], 256
    $region45: #{_lambda_.1} parent=1 // pred_fallthru
      _
    // Predicated region
    $region46: #{_lambda_.1} parent=1 // pred_check
      _
    $region47: #{_lambda_.1} parent=1 // pred_check_branch
      %99 = sbr.rel (0) target = $region49
    $region48: #{_lambda_.1} parent=1 // pred_region
      %101 = dma.done [#allocation6], 3072
    $region49: #{_lambda_.1} parent=1 // pred_fallthru
      _
    // Predicated region
    $region50: #{_lambda_.1} parent=1 // pred_check
      _
    $region51: #{_lambda_.1} parent=1 // pred_check_branch
      %103 = sbr.rel (0) target = $region53
    $region52: #{_lambda_.1} parent=1 // pred_region
      %105 = dma.done [#allocation6], 1024
    $region53: #{_lambda_.1} parent=1 // pred_fallthru
      _
    // Predicated region
    $region54: #{_lambda_.1} parent=1 // pred_check
      _
    $region55: #{_lambda_.1} parent=1 // pred_check_branch
      %107 = sbr.rel (0) target = $region57
    $region56: #{_lambda_.1} parent=1 // pred_region
      %109 = dma.done [#allocation9], 1024
    $region57: #{_lambda_.1} parent=1 // pred_fallthru
      _
    // Predicated region
    $region58: #{_lambda_.1} parent=1 // pred_check
      _
    $region59: #{_lambda_.1} parent=1 // pred_check_branch
      %111 = sbr.rel (0) target = $region61
    $region60: #{_lambda_.1} parent=1 // pred_region
      %113 = dma.done [#allocation9], 1024
    $region61: #{_lambda_.1} parent=1 // pred_fallthru
      _
    %v115 = vld [vmem:[#allocation2] sm:$0xff]
    %v116 = vld [vmem:[#allocation2 + $0x8] sm:$0xff]
    %v117 = vpack.c.bf16 %v116, %v115
    %v118 = vld [vmem:[%s1] sm:$0x1]
    %v119 = vld [vmem:[%s1 + $0x1] sm:$0x1]
    %v120 = vld [vmem:[#allocation5] sm:$0xff]
    %v121 = vld [vmem:[#allocation5 + $0x8] sm:$0xf]
    %v122 = vld [vmem:[#allocation5 + $0xc] sm:$0xff]
    %v123 = vld [vmem:[#allocation5 + $0x14] sm:$0xf]
    %v124 = vld [vmem:[#allocation5 + $0x18] sm:$0xff]
    %v125 = vld [vmem:[#allocation5 + $0x20] sm:$0xf]
    %v126 = vld [vmem:[#allocation5 + $0x24] sm:$0xff]
    %v127 = vld [vmem:[#allocation5 + $0x2c] sm:$0xf]
    %v128 = vld [vmem:[#allocation5 + $0x30] sm:$0xff]
    %v129 = vld [vmem:[#allocation5 + $0x38] sm:$0xf]
    %v130 = vld [vmem:[#allocation5 + $0x3c] sm:$0xff]
    %v131 = vld [vmem:[#allocation5 + $0x44] sm:$0xf]
    %v132 = vld [vmem:[#allocation5 + $0x48] sm:$0xff]
    %v133 = vld [vmem:[#allocation5 + $0x50] sm:$0xf]
    %v134 = vld [vmem:[#allocation5 + $0x54] sm:$0xff]
    %v135 = vld [vmem:[#allocation5 + $0x5c] sm:$0xf]
    %v136 = vld [vmem:[#allocation5 + $0x60] sm:$0xff]
    %v137 = vld [vmem:[#allocation5 + $0x68] sm:$0xf]
    %v138 = vld [vmem:[#allocation5 + $0x6c] sm:$0xff]
    %v139 = vld [vmem:[#allocation5 + $0x74] sm:$0xf]
    %v140 = vld [vmem:[#allocation5 + $0x78] sm:$0xff]
    %v141 = vld [vmem:[#allocation5 + $0x80] sm:$0xf]
    %v142 = vld [vmem:[#allocation5 + $0x84] sm:$0xff]
    %v143 = vld [vmem:[#allocation5 + $0x8c] sm:$0xf]
    %v144 = vld [vmem:[#allocation5 + $0x90] sm:$0xff]
    %v145 = vld [vmem:[#allocation5 + $0x98] sm:$0xf]
    %v146 = vld [vmem:[#allocation5 + $0x9c] sm:$0xff]
    %v147 = vld [vmem:[#allocation5 + $0xa4] sm:$0xf]
    %v148 = vld [vmem:[#allocation5 + $0xa8] sm:$0xff]
    %v149 = vld [vmem:[#allocation5 + $0xb0] sm:$0xf]
    %v150 = vld [vmem:[#allocation5 + $0xb4] sm:$0xff]
    %v151 = vld [vmem:[#allocation5 + $0xbc] sm:$0xf]
    %v152 = vld [vmem:[%s3] sm:$0x7]
    %v154 = vperm.slane %v152, 0
    %v155 = vperm.slane %v152, 1
    %v156 = vperm.slane %v152, 2
    %v192 = vunpack.c.l.b16 %v120
    %v193 = vunpack.c.h.b16 %v120
    %v194 = vunpack.c.l.b16 %v121
    %v195 = vunpack.c.l.b16 %v122
    %v196 = vunpack.c.h.b16 %v122
    %v197 = vunpack.c.l.b16 %v123
    %v198 = vunpack.c.l.b16 %v124
    %v199 = vunpack.c.h.b16 %v124
    %v200 = vunpack.c.l.b16 %v125
    %v201 = vunpack.c.l.b16 %v126
    %v202 = vunpack.c.h.b16 %v126
    %v203 = vunpack.c.l.b16 %v127
    %v204 = vunpack.c.l.b16 %v128
    %v205 = vunpack.c.h.b16 %v128
    %v206 = vunpack.c.l.b16 %v129
    %v207 = vunpack.c.l.b16 %v130
    %v208 = vunpack.c.h.b16 %v130
    %v209 = vunpack.c.l.b16 %v131
    %v210 = vunpack.c.l.b16 %v132
    %v211 = vunpack.c.h.b16 %v132
    %v212 = vunpack.c.l.b16 %v133
    %v213 = vunpack.c.l.b16 %v134
    %v214 = vunpack.c.h.b16 %v134
    %v215 = vunpack.c.l.b16 %v135
    %v216 = vunpack.c.l.b16 %v136
    %v217 = vunpack.c.h.b16 %v136
    %v218 = vunpack.c.l.b16 %v137
    %v219 = vunpack.c.l.b16 %v138
    %v220 = vunpack.c.h.b16 %v138
    %v221 = vunpack.c.l.b16 %v139
    %v222 = vunpack.c.l.b16 %v140
    %v223 = vunpack.c.h.b16 %v140
    %v224 = vunpack.c.l.b16 %v141
    %v225 = vunpack.c.l.b16 %v142
    %v226 = vunpack.c.h.b16 %v142
    %v227 = vunpack.c.l.b16 %v143
    %v228 = vunpack.c.l.b16 %v144
    %v229 = vunpack.c.h.b16 %v144
    %v230 = vunpack.c.l.b16 %v145
    %v231 = vunpack.c.l.b16 %v146
    %v232 = vunpack.c.h.b16 %v146
    %v233 = vunpack.c.l.b16 %v147
    %v234 = vunpack.c.l.b16 %v148
    %v235 = vunpack.c.h.b16 %v148
    %v236 = vunpack.c.l.b16 %v149
    %v237 = vunpack.c.l.b16 %v150
    %v238 = vunpack.c.h.b16 %v150
    %v239 = vunpack.c.l.b16 %v151
    %v240 = vpack.c.b16 %v195, %v192
    %v241 = vpack.c.b16 %v196, %v193
    %v242 = vpack.c.b16 %v197, %v194
    %v243 = vpack.c.b16 %v201, %v198
    %v244 = vpack.c.b16 %v202, %v199
    %v245 = vpack.c.b16 %v203, %v200
    %v246 = vpack.c.b16 %v207, %v204
    %v247 = vpack.c.b16 %v208, %v205
    %v248 = vpack.c.b16 %v209, %v206
    %v249 = vpack.c.b16 %v213, %v210
    %v250 = vpack.c.b16 %v214, %v211
    %v251 = vpack.c.b16 %v215, %v212
    %v252 = vpack.c.b16 %v219, %v216
    %v253 = vpack.c.b16 %v220, %v217
    %v254 = vpack.c.b16 %v221, %v218
    %v255 = vpack.c.b16 %v225, %v222
    %v256 = vpack.c.b16 %v226, %v223
    %v257 = vpack.c.b16 %v227, %v224
    %v258 = vpack.c.b16 %v231, %v228
    %v259 = vpack.c.b16 %v232, %v229
    %v260 = vpack.c.b16 %v233, %v230
    %v261 = vpack.c.b16 %v237, %v234
    %v262 = vpack.c.b16 %v238, %v235
    %v263 = vpack.c.b16 %v239, %v236
    %288 = vmatpush.bf16.msra.mxu0 %v261
    %289 = vmatpush.bf16.msra.mxu0 %v258
    %290 = vmatpush.bf16.msra.mxu0 %v255
    %291 = vmatpush.bf16.msra.mxu0 %v252
    %292 = vmatpush.bf16.msra.mxu0 %v249
    %293 = vmatpush.bf16.msra.mxu0 %v246
    %294 = vmatpush.bf16.msra.mxu0 %v243
    %295 = vmatpush.bf16.msra.mxu0 %v240
    %296 = vmatmul.bf16.gmra.mxu0 %v117
    %v297 = vpop.f32.mrf.mxu0
    %v298 = vadd.f32 %v154, %v297
    %v299 = vpop.f32.mrf.mxu0
    %v300 = vadd.f32 %v154, %v299
    %301 = vdwg.mxu0
    %302 = vmatpush.bf16.msra.mxu0 %v262
    %303 = vmatpush.bf16.msra.mxu0 %v259
    %304 = vmatpush.bf16.msra.mxu0 %v256
    %305 = vmatpush.bf16.msra.mxu0 %v253
    %306 = vmatpush.bf16.msra.mxu0 %v250
    %307 = vmatpush.bf16.msra.mxu0 %v247
    %308 = vmatpush.bf16.msra.mxu0 %v244
    %309 = vmatpush.bf16.msra.mxu0 %v241
    %310 = vmatmul.bf16.gmra.mxu0 %v117
    %v311 = vpop.f32.mrf.mxu0
    %v312 = vadd.f32 %v155, %v311
    %v313 = vpop.f32.mrf.mxu0
    %v314 = vadd.f32 %v155, %v313
    %315 = vdwg.mxu0
    %316 = vmatpush.bf16.msra.mxu0 %v263
    %317 = vmatpush.bf16.msra.mxu0 %v260
    %318 = vmatpush.bf16.msra.mxu0 %v257
    %319 = vmatpush.bf16.msra.mxu0 %v254
    %320 = vmatpush.bf16.msra.mxu0 %v251
    %321 = vmatpush.bf16.msra.mxu0 %v248
    %322 = vmatpush.bf16.msra.mxu0 %v245
    %323 = vmatpush.bf16.msra.mxu0 %v242
    %324 = vmatmul.bf16.gmra.mxu0 %v117
    %v325 = vpop.f32.mrf.mxu0
    %v326 = vadd.f32 %v156, %v325
    %v327 = vpop.f32.mrf.mxu0
    %v328 = vadd.f32 %v156, %v327
    %329 = vdwg.mxu0
    %v330 = vpack.c.bf16 %v298, %v298
    %v331 = vpack.c.bf16 %v300, %v300
    %v332 = vpack.c.bf16 %v312, %v312
    %v333 = vpack.c.bf16 %v314, %v314
    %v334 = vpack.c.bf16 %v326, %v326
    %v335 = vpack.c.bf16 %v328, %v328
    %v336 = vsub.f32 %v118, 1.0
    %v337 = vsub.f32 %v119, 1.0
    %v338 = vmul.f32 %v336, 1e+30
    %v339 = vmul.f32 %v337, 1e+30
    %v342 = vperm.slane %v338, 0
    %v343 = vperm.slane %v339, 0
    %346 = vmatpush.bf16.xpose.msra.mxu0 0
    %347 = vmatpush.bf16.xpose.msra.mxu0 0
    %348 = vmatpush.bf16.xpose.msra.mxu0 0
    %349 = vmatpush.bf16.xpose.msra.mxu0 0
    %350 = vmatpush.bf16.xpose.msra.mxu0 0
    %351 = vmatpush.bf16.xpose.msra.mxu0 0
    %352 = vmatpush.bf16.xpose.msra.mxu0 0
    %353 = vmatpush.bf16.xpose.msra.mxu0 %v332
    %354 = vmatmul.bf16.gmra.mxu0 %v330
    %v355 = vpop.f32.mrf.mxu0
    %v356 = vadd.f32 %v342, %v355
    %v357 = vpop.f32.mrf.mxu0
    %358 = vdwg.mxu0
    %359 = vmatpush.bf16.xpose.msra.mxu0 0
    %360 = vmatpush.bf16.xpose.msra.mxu0 0
    %361 = vmatpush.bf16.xpose.msra.mxu0 0
    %362 = vmatpush.bf16.xpose.msra.mxu0 0
    %363 = vmatpush.bf16.xpose.msra.mxu0 0
    %364 = vmatpush.bf16.xpose.msra.mxu0 0
    %365 = vmatpush.bf16.xpose.msra.mxu0 0
    %366 = vmatpush.bf16.xpose.msra.mxu0 %v333
    %367 = vmatmul.bf16.gmra.mxu0 %v331
    %v368 = vpop.f32.mrf.mxu0
    %v369 = vadd.f32 %v343, %v368
    %v370 = vpop.f32.mrf.mxu0
    %371 = vdwg.mxu0
    %vm372 = vcmask 64512
    %v373 = vsel %vm372, %v356, -inf
    %374 = vmax.xlane.f32.xlu0 %v373
    %v375 = vpop.xlane.xlu0 %374
    %v376 = vsel %vm372, %v369, -inf
    %377 = vmax.xlane.f32.xlu0 %v376
    %v378 = vpop.xlane.xlu0 %377
    %v379 = vsub.f32 %v356, %v375
    %v380 = vsub.f32 %v369, %v378
    %v381 = vmul.f32 %v379, 1.442695
    %v382 = vpow.pop %v381
    %v383 = vmul.f32 %v380, 1.442695
    %v384 = vpow.pop %v383
    %v385 = vsel %vm372, %v382, 0.0
    %386 = vadd.xlane.f32.xlu0 %v385
    %v387 = vpop.xlane.xlu0 %386
    %v388 = vsel %vm372, %v384, 0.0
    %389 = vadd.xlane.f32.xlu0 %v388
    %v390 = vpop.xlane.xlu0 %389
    %v391 = vrcp.pop %v387
    %v392 = vrcp.pop %v390
    %v393 = vmul.f32 %v382, %v391
    %v394 = vmul.f32 %v384, %v392
    %v395 = vperm.slane %v118, 0
    %v396 = vlaneseq
    %v397 = vshrl.u32 %v396, 7
    %399 = vset.pattern.permute.xlu0 %v397
    %400 = vperm.xlu0 %399, %v395
    %v401 = vpop.permute.xlu0 %400
    %v402 = vperm.slane %v119, 0
    %v403 = vlaneseq
    %v404 = vshrl.u32 %v403, 7
    %406 = vset.pattern.permute.xlu0 %v404
    %407 = vperm.xlu0 %406, %v402
    %v408 = vpop.permute.xlu0 %407
    %v409 = vmul.f32 %v401, %v393
    %v410 = vmul.f32 %v408, %v394
    %v411 = vsel %vm372, %v409, 0.0
    %v412 = vrot.slane %v411, 4
    %v413 = vadd.f32 %v411, %v412
    %v414 = vrot.slane %v413, 2
    %v415 = vadd.f32 %v413, %v414
    %v416 = vrot.slane %v415, 1
    %v417 = vadd.f32 %v415, %v416
    %v418 = vsel %vm372, %v410, 0.0
    %v419 = vrot.slane %v418, 4
    %v420 = vadd.f32 %v418, %v419
    %v421 = vrot.slane %v420, 2
    %v422 = vadd.f32 %v420, %v421
    %v423 = vrot.slane %v422, 1
    %v424 = vadd.f32 %v422, %v423
    %v425 = vmul.f32 %v417, 0.125
    %v426 = vmul.f32 %v424, 0.125
    %v427 = vpack.c.bf16 %v425, %v425
    %v428 = vpack.c.bf16 %v426, %v426
    %v430 = vsel %vm372, %v427, 0
    %vm432 = vcmask 1043456
    %v434 = vsel %vm432, %v334, 0
    %436 = vmatpush.bf16.msra.mxu0 0
    %437 = vmatpush.bf16.msra.mxu0 0
    %438 = vmatpush.bf16.msra.mxu0 0
    %439 = vmatpush.bf16.msra.mxu0 0
    %440 = vmatpush.bf16.msra.mxu0 0
    %441 = vmatpush.bf16.msra.mxu0 0
    %442 = vmatpush.bf16.msra.mxu0 0
    %443 = vmatpush.bf16.msra.mxu0 %v434
    %444 = vmatmul.bf16.gmra.mxu0 %v430
    %v445 = vpop.f32.mrf.mxu0
    %v446 = vadd.f32 0.0, %v445
    %v447 = vpop.f32.mrf.mxu0
    %448 = vdwg.mxu0
    %v450 = vsel %vm372, %v428, 0
    %v453 = vsel %vm432, %v335, 0
    %455 = vmatpush.bf16.msra.mxu0 0
    %456 = vmatpush.bf16.msra.mxu0 0
    %457 = vmatpush.bf16.msra.mxu0 0
    %458 = vmatpush.bf16.msra.mxu0 0
    %459 = vmatpush.bf16.msra.mxu0 0
    %460 = vmatpush.bf16.msra.mxu0 0
    %461 = vmatpush.bf16.msra.mxu0 0
    %462 = vmatpush.bf16.msra.mxu0 %v453
    %463 = vmatmul.bf16.gmra.mxu0 %v450
    %v464 = vpop.f32.mrf.mxu0
    %v465 = vadd.f32 0.0, %v464
    %v466 = vpop.f32.mrf.mxu0
    %467 = vdwg.mxu0
    %470 = vst [vmem:[#allocation1] ss:$9 sm:$0xff] %v118
    %s471 = scalar_lea.vmem [#allocation1], 1
    %472 = vst [vmem:[%s471] ss:$9 sm:$0xff] %v119
    %v473 = vld [vmem:[#allocation1] sm:$0xff]
    %vm475 = vcmask 58368
    %v476 = vsel %vm475, %v473, 0.0
    %477 = vadd.xlane.f32.xlu0 %v476
    %v478 = vpop.xlane.xlu0 %477
    %v479 = vrcp.pop 8.0
    %v480 = vmul.f32 8.0, %v479
    %v481 = vsub.f32 1.0, %v480
    %v482 = vmul.f32 %v479, %v481
    %v483 = vadd.f32 %v479, %v482
    %vm484 = vweird.f32 %v479
    %v485 = vsel %vm484, %v479, %v483
    %v486 = vmul.f32 %v478, %v485
    %v487 = vpack.c.bf16 %v446, %v446
    %v488 = vpack.c.bf16 %v465, %v465
    %v489 = vld [vmem:[#allocation7] sm:$0xf]
    %v490 = vld [vmem:[#allocation7 + $0x4] sm:$0xf]
    %v491 = vld [vmem:[#allocation7 + $0x8] sm:$0xf]
    %v492 = vld [vmem:[#allocation7 + $0xc] sm:$0xf]
    %v493 = vld [vmem:[#allocation7 + $0x10] sm:$0xf]
    %v494 = vld [vmem:[#allocation7 + $0x14] sm:$0xf]
    %v495 = vld [vmem:[#allocation7 + $0x18] sm:$0xf]
    %v496 = vld [vmem:[#allocation7 + $0x1c] sm:$0xf]
    %v497 = vld [vmem:[#allocation7 + $0x20] sm:$0xf]
    %v498 = vld [vmem:[#allocation7 + $0x24] sm:$0xf]
    %v499 = vld [vmem:[#allocation7 + $0x28] sm:$0xf]
    %v500 = vld [vmem:[#allocation7 + $0x2c] sm:$0xf]
    %v501 = vld [vmem:[#allocation7 + $0x30] sm:$0xf]
    %v502 = vld [vmem:[#allocation7 + $0x34] sm:$0xf]
    %v503 = vld [vmem:[#allocation7 + $0x38] sm:$0xf]
    %v504 = vld [vmem:[#allocation7 + $0x3c] sm:$0xf]
    %v505 = vld [vmem:[%s5] sm:$0x1]
    %v507 = vperm.slane %v505, 0
    %v509 = vmul.f32 %v486, %v507
    %v512 = vunpack.c.l.b16 %v487
    %v513 = vunpack.c.l.b16 %v488
    %v514 = vrot.slane %v513, 7
    %vm515 = vcmask 1041409
    %v516 = vsel %vm515, %v514, %v512
    %v517 = vpack.c.b16 %v516, %v516
    %v535 = vunpack.c.l.b16 %v489
    %v536 = vunpack.c.l.b16 %v490
    %v537 = vunpack.c.l.b16 %v491
    %v538 = vunpack.c.l.b16 %v492
    %v539 = vunpack.c.l.b16 %v493
    %v540 = vunpack.c.l.b16 %v494
    %v541 = vunpack.c.l.b16 %v495
    %v542 = vunpack.c.l.b16 %v496
    %v543 = vunpack.c.l.b16 %v497
    %v544 = vunpack.c.l.b16 %v498
    %v545 = vunpack.c.l.b16 %v499
    %v546 = vunpack.c.l.b16 %v500
    %v547 = vunpack.c.l.b16 %v501
    %v548 = vunpack.c.l.b16 %v502
    %v549 = vunpack.c.l.b16 %v503
    %v550 = vunpack.c.l.b16 %v504
    %v551 = vpack.c.b16 %v536, %v535
    %v552 = vpack.c.b16 %v538, %v537
    %v553 = vpack.c.b16 %v540, %v539
    %v554 = vpack.c.b16 %v542, %v541
    %v555 = vpack.c.b16 %v544, %v543
    %v556 = vpack.c.b16 %v546, %v545
    %v557 = vpack.c.b16 %v548, %v547
    %v558 = vpack.c.b16 %v550, %v549
    %567 = vmatpush.bf16.msra.mxu0 %v558
    %568 = vmatpush.bf16.msra.mxu0 %v557
    %569 = vmatpush.bf16.msra.mxu0 %v556
    %570 = vmatpush.bf16.msra.mxu0 %v555
    %571 = vmatpush.bf16.msra.mxu0 %v554
    %572 = vmatpush.bf16.msra.mxu0 %v553
    %573 = vmatpush.bf16.msra.mxu0 %v552
    %574 = vmatpush.bf16.msra.mxu0 %v551
    %575 = vmatmul.bf16.gmra.mxu0 %v517
    %v576 = vpop.f32.mrf.mxu0
    %v577 = vadd.f32 %v509, %v576
    %v578 = vpop.f32.mrf.mxu0
    %579 = vdwg.mxu0
    %v580 = vpack.c.bf16 %v577, %v577
    %v581 = vld [vmem:[#allocation8] sm:$0xf]
    %v582 = vld [vmem:[#allocation8 + $0x4] sm:$0xf]
    %v583 = vld [vmem:[#allocation8 + $0x8] sm:$0xf]
    %v584 = vld [vmem:[#allocation8 + $0xc] sm:$0xf]
    %v585 = vld [vmem:[#allocation8 + $0x10] sm:$0xf]
    %v586 = vld [vmem:[#allocation8 + $0x14] sm:$0xf]
    %v587 = vld [vmem:[#allocation8 + $0x18] sm:$0xf]
    %v588 = vld [vmem:[#allocation8 + $0x1c] sm:$0xf]
    %v589 = vld [vmem:[#allocation8 + $0x20] sm:$0xf]
    %v590 = vld [vmem:[#allocation8 + $0x24] sm:$0xf]
    %v591 = vld [vmem:[#allocation8 + $0x28] sm:$0xf]
    %v592 = vld [vmem:[#allocation8 + $0x2c] sm:$0xf]
    %v593 = vld [vmem:[#allocation8 + $0x30] sm:$0xf]
    %v594 = vld [vmem:[#allocation8 + $0x34] sm:$0xf]
    %v595 = vld [vmem:[#allocation8 + $0x38] sm:$0xf]
    %v596 = vld [vmem:[#allocation8 + $0x3c] sm:$0xf]
    %v597 = vld [vmem:[%s7] sm:$0x1]
    %v599 = vperm.slane %v597, 0
    %v617 = vunpack.c.l.b16 %v581
    %v618 = vunpack.c.l.b16 %v582
    %v619 = vunpack.c.l.b16 %v583
    %v620 = vunpack.c.l.b16 %v584
    %v621 = vunpack.c.l.b16 %v585
    %v622 = vunpack.c.l.b16 %v586
    %v623 = vunpack.c.l.b16 %v587
    %v624 = vunpack.c.l.b16 %v588
    %v625 = vunpack.c.l.b16 %v589
    %v626 = vunpack.c.l.b16 %v590
    %v627 = vunpack.c.l.b16 %v591
    %v628 = vunpack.c.l.b16 %v592
    %v629 = vunpack.c.l.b16 %v593
    %v630 = vunpack.c.l.b16 %v594
    %v631 = vunpack.c.l.b16 %v595
    %v632 = vunpack.c.l.b16 %v596
    %v633 = vpack.c.b16 %v618, %v617
    %v634 = vpack.c.b16 %v620, %v619
    %v635 = vpack.c.b16 %v622, %v621
    %v636 = vpack.c.b16 %v624, %v623
    %v637 = vpack.c.b16 %v626, %v625
    %v638 = vpack.c.b16 %v628, %v627
    %v639 = vpack.c.b16 %v630, %v629
    %v640 = vpack.c.b16 %v632, %v631
    %649 = vmatpush.bf16.msra.mxu0 %v640
    %650 = vmatpush.bf16.msra.mxu0 %v639
    %651 = vmatpush.bf16.msra.mxu0 %v638
    %652 = vmatpush.bf16.msra.mxu0 %v637
    %653 = vmatpush.bf16.msra.mxu0 %v636
    %654 = vmatpush.bf16.msra.mxu0 %v635
    %655 = vmatpush.bf16.msra.mxu0 %v634
    %656 = vmatpush.bf16.msra.mxu0 %v633
    %657 = vmatmul.bf16.gmra.mxu0 %v580
    %v658 = vpop.f32.mrf.mxu0
    %v659 = vadd.f32 %v599, %v658
    %v660 = vpop.f32.mrf.mxu0
    %661 = vdwg.mxu0
    %v662 = vmax.f32 %v659, 0.0
    %v663 = vpack.c.bf16 %v662, %v662
    %v664 = vld [vmem:[#allocation10] sm:$0xf]
    %v665 = vld [vmem:[#allocation10 + $0x4] sm:$0xf]
    %v666 = vld [vmem:[#allocation10 + $0x8] sm:$0xf]
    %v667 = vld [vmem:[#allocation10 + $0xc] sm:$0xf]
    %v668 = vld [vmem:[#allocation10 + $0x10] sm:$0xf]
    %v669 = vld [vmem:[#allocation10 + $0x14] sm:$0xf]
    %v670 = vld [vmem:[#allocation10 + $0x18] sm:$0xf]
    %v671 = vld [vmem:[#allocation10 + $0x1c] sm:$0xf]
    %v672 = vld [vmem:[#allocation10 + $0x20] sm:$0xf]
    %v673 = vld [vmem:[#allocation10 + $0x24] sm:$0xf]
    %v674 = vld [vmem:[#allocation10 + $0x28] sm:$0xf]
    %v675 = vld [vmem:[#allocation10 + $0x2c] sm:$0xf]
    %v676 = vld [vmem:[#allocation10 + $0x30] sm:$0xf]
    %v677 = vld [vmem:[#allocation10 + $0x34] sm:$0xf]
    %v678 = vld [vmem:[#allocation10 + $0x38] sm:$0xf]
    %v679 = vld [vmem:[#allocation10 + $0x3c] sm:$0xf]
    %v680 = vld [vmem:[%s9] sm:$0x1]
    %v682 = vperm.slane %v680, 0
    %v700 = vunpack.c.l.b16 %v664
    %v701 = vunpack.c.l.b16 %v665
    %v702 = vunpack.c.l.b16 %v666
    %v703 = vunpack.c.l.b16 %v667
    %v704 = vunpack.c.l.b16 %v668
    %v705 = vunpack.c.l.b16 %v669
    %v706 = vunpack.c.l.b16 %v670
    %v707 = vunpack.c.l.b16 %v671
    %v708 = vunpack.c.l.b16 %v672
    %v709 = vunpack.c.l.b16 %v673
    %v710 = vunpack.c.l.b16 %v674
    %v711 = vunpack.c.l.b16 %v675
    %v712 = vunpack.c.l.b16 %v676
    %v713 = vunpack.c.l.b16 %v677
    %v714 = vunpack.c.l.b16 %v678
    %v715 = vunpack.c.l.b16 %v679
    %v716 = vpack.c.b16 %v701, %v700
    %v717 = vpack.c.b16 %v703, %v702
    %v718 = vpack.c.b16 %v705, %v704
    %v719 = vpack.c.b16 %v707, %v706
    %v720 = vpack.c.b16 %v709, %v708
    %v721 = vpack.c.b16 %v711, %v710
    %v722 = vpack.c.b16 %v713, %v712
    %v723 = vpack.c.b16 %v715, %v714
    %732 = vmatpush.bf16.msra.mxu0 %v723
    %733 = vmatpush.bf16.msra.mxu0 %v722
    %734 = vmatpush.bf16.msra.mxu0 %v721
    %735 = vmatpush.bf16.msra.mxu0 %v720
    %736 = vmatpush.bf16.msra.mxu0 %v719
    %737 = vmatpush.bf16.msra.mxu0 %v718
    %738 = vmatpush.bf16.msra.mxu0 %v717
    %739 = vmatpush.bf16.msra.mxu0 %v716
    %740 = vmatmul.bf16.gmra.mxu0 %v663
    %v741 = vpop.f32.mrf.mxu0
    %v742 = vadd.f32 %v682, %v741
    %v743 = vpop.f32.mrf.mxu0
    %744 = vdwg.mxu0
    %v746 = vrot.slane %v742, 1
    %748 = vst [vmem:[#allocation11] sm:$0x1] %v742
    %749 = vst [vmem:[#allocation11 + $0x1] sm:$0x1] %v746
    // Predicated region
    $region62: #{_lambda_.1} parent=1 // pred_check
      _
    $region63: #{_lambda_.1} parent=1 // pred_check_branch
      %751 = sbr.rel (0) target = $region65
    $region64: #{_lambda_.1} parent=1 // pred_region
      %753 = vsyncadd [#allocation4], 0
      %s754 = sshll.u32 [#allocation11], 4
      %s755 = int_to_ptr.vmem [resolvable:$true] %s754
      %s756 = sshll.u32 %s10, 4
      %s757 = int_to_ptr.hbm [resolvable:$true] %s756
      %762 = dma.vmem_to_hbm [thread:$0]  %s755, 32, %s757, [#allocation4], 16, 16, 1
    $region65: #{_lambda_.1} parent=1 // pred_fallthru
      _
    // Predicated region
    $region66: #{_lambda_.1} parent=1 // pred_check
      _
    $region67: #{_lambda_.1} parent=1 // pred_check_branch
      %764 = sbr.rel (0) target = $region69
    $region68: #{_lambda_.1} parent=1 // pred_region
      %766 = dma.done [#allocation4], 32
    $region69: #{_lambda_.1} parent=1 // pred_fallthru
      _
    %767 = vsyncpa [#allocation3], 1
    %768 = vsyncpa [#allocation6], 1
    %769 = vsyncpa [#allocation9], 1
    %770 = vsyncpa [#allocation4], 1

</llo_original>
